<compile_context>
chip_gen: v7x
topology: tpu7x:2x2x1
jax: 0.10.0
libtpu: 0.0.40
codegen_flags: <defaults>
</compile_context>

<pallas_src>
import functools

import jax
import jax.numpy as jnp
from jax.experimental import pallas as pl
from jax.experimental.pallas import tpu as pltpu

KH = KW = 3  # kernel_size = 3


def _round_up(x, m):
    return (x + m - 1) // m * m


def _shiftwise_conv_kernel(x_ref, w_ref, b_ref, o_ref, col_ref, *, pitch):
    # x_ref  : (1, C, Lin)       pre-shifted, zero-padded input, flattened with
    #                            row pitch `pitch` (= W + 2), one image.
    # w_ref  : (Co, KH*KW*C)     conv weight with the 9 taps folded into K.
    # b_ref  : (Co, 1)           conv bias.
    # o_ref  : (1, Co, Nout)     lane-dense flat output (row pitch = `pitch`).
    # col_ref: (KH*KW*C, Nout)   VMEM im2col scratch.
    C = x_ref.shape[1]
    Nout = o_ref.shape[2]

    # Build im2col: tap (kh, kw) is a pure lane shift by kh*pitch + kw because
    # the flat input and flat output share the same row pitch.
    for kh in range(KH):
        for kw in range(KW):
            k = kh * KW + kw
            off = kh * pitch + kw
            col_ref[k * C:(k + 1) * C, :] = x_ref[0, :, off:off + Nout]

    # One deep MXU matmul: (Co, 9C) @ (9C, Nout), f32 accumulation.
    acc = jnp.dot(w_ref[...], col_ref[...], preferred_element_type=jnp.float32)
    o_ref[0] = (acc + b_ref[...]).astype(o_ref.dtype)


def shiftwise_conv2d(x, weight, bias,
                     shift_directions=((0, 1), (1, 0), (0, -1), (-1, 0))):
    """x: (N, C, H, W) f32; weight: (Co, C, 3, 3); bias: (Co,)."""
    N, C, H, W = x.shape
    Co = weight.shape[0]
    nshift = len(shift_directions)
    assert C % nshift == 0, "channels must be divisible by number of shifts"
    chunk = C // nshift

    # --- Wrapper glue (pure data movement, fuses in XLA) -------------------
    # Per-chunk circular shift along (H, W), concat, zero-pad by 1.
    parts = []
    for i, (sh, sw) in enumerate(shift_directions):
        parts.append(jnp.roll(x[:, i * chunk:(i + 1) * chunk],
                              shift=(sh, sw), axis=(2, 3)))
    xs = jnp.concatenate(parts, axis=1)

    Hp, Wp = H + 2, W + 2
    # Lane-dense flat output length (multiple of 128); extra columns are junk
    # that gets sliced away below.
    Nout = _round_up(H * Wp, 128)
    # Flat input length: must cover the largest tap offset (2*Wp + 2) past the
    # last output column; pad tail with zeros and round for alignment.
    Lin = _round_up(Nout + 2 * Wp + 2, 128)

    xpad = jnp.pad(xs, ((0, 0), (0, 0), (1, 1), (1, 1)))          # padding = 1
    xflat = xpad.reshape(N, C, Hp * Wp)
    xflat = jnp.pad(xflat, ((0, 0), (0, 0), (0, Lin - Hp * Wp)))  # zero tail

    # Weight: (Co, C, 3, 3) -> (Co, 3, 3, C) -> (Co, 9*C) so column block
    # k*C:(k+1)*C matches im2col row block of tap k = kh*3 + kw.
    w2 = jnp.transpose(weight, (0, 2, 3, 1)).reshape(Co, KH * KW * C)
    b2 = bias.reshape(Co, 1)

    kernel = functools.partial(_shiftwise_conv_kernel, pitch=Wp)

    out_flat = pl.pallas_call(
        kernel,
        out_shape=jax.ShapeDtypeStruct((N, Co, Nout), x.dtype),
        grid_spec=pltpu.PrefetchScalarGridSpec(
            num_scalar_prefetch=0,
            grid=(N,),
            in_specs=[
                pl.BlockSpec((1, C, Lin), lambda n: (n, 0, 0)),
                pl.BlockSpec((Co, KH * KW * C), lambda n: (0, 0)),
                pl.BlockSpec((Co, 1), lambda n: (0, 0)),
            ],
            out_specs=pl.BlockSpec((1, Co, Nout), lambda n: (n, 0, 0)),
            scratch_shapes=[pltpu.VMEM((KH * KW * C, Nout), x.dtype)],
        ),
        compiler_params=pltpu.CompilerParams(
            dimension_semantics=("parallel",)),
    )(xflat, w2, b2)

    # Unpack lane-dense flat output: take the H*Wp prefix, view as (H, Wp),
    # drop the 2 junk columns per row. Metadata-only ops in XLA.
    out = out_flat[:, :, :H * Wp].reshape(N, Co, H, Wp)[:, :, :, :W]
    return out


def _reference(x, weight, bias,
               shift_directions=((0, 1), (1, 0), (0, -1), (-1, 0))):
    N, C, H, W = x.shape
    Co = weight.shape[0]
    chunk = C // len(shift_directions)
    parts = []
    for i, (sh, sw) in enumerate(shift_directions):
        parts.append(jnp.roll(x[:, i * chunk:(i + 1) * chunk],
                              shift=(sh, sw), axis=(2, 3)))
    xs = jnp.concatenate(parts, axis=1)
    out = jax.lax.conv_general_dilated(
        xs, weight, window_strides=(1, 1), padding=((1, 1), (1, 1)),
        dimension_numbers=("NCHW", "OIHW", "NCHW"))
    return out + bias.reshape(1, Co, 1, 1)


if __name__ == "__main__":
    # Small shapes consistent with the module: 4 shift directions -> C % 4 == 0.
    N, C, Co, H, W = 2, 4, 8, 16, 16

    key = jax.random.PRNGKey(0)
    kx, kw, kb = jax.random.split(key, 3)
    x = jax.random.normal(kx, (N, C, H, W), dtype=jnp.float32)
    # Deterministic synthetic parameters (shapes match nn.Conv2d(C, Co, 3, 1, 1)).
    weight = jax.random.normal(kw, (Co, C, KH, KW), dtype=jnp.float32) * 0.1
    bias = jax.random.normal(kb, (Co,), dtype=jnp.float32) * 0.1

    out = shiftwise_conv2d(x, weight, bias)
    out = jax.block_until_ready(out)

    ref = jax.block_until_ready(_reference(x, weight, bias))
    assert out.shape == (N, Co, H, W)
    assert jnp.allclose(out, ref, atol=1e-3, rtol=1e-3), "mismatch vs reference"

    print("KERNEL_OK")
</pallas_src>

<mosaic_0001>
module attributes {stable_mosaic.version = 11 : i64} {
  func.func @_shiftwise_conv_kernel(%arg0: i32, %arg1: memref<1x4x512xf32, #tpu.memory_space<vmem>>, %arg2: memref<8x36xf32, #tpu.memory_space<vmem>>, %arg3: memref<8x1xf32, #tpu.memory_space<vmem>>, %arg4: memref<1x8x384xf32, #tpu.memory_space<vmem>>, %arg5: memref<36x384xf32, #tpu.memory_space<vmem>>) attributes {dimension_semantics = [#tpu.dimension_semantics<parallel>], iteration_bounds = array<i64: 2>, scalar_prefetch = 0 : i64, scratch_operands = 1 : i64, tpu.core_type = #tpu.core_type<tc>, window_params = [{transform_indices = @transform_0, window_bounds = array<i64: 1, 4, 512>}, {pipeline_mode = #tpu.pipeline_mode<synchronous>, transform_indices = @transform_1, window_bounds = array<i64: 8, 36>}, {pipeline_mode = #tpu.pipeline_mode<synchronous>, transform_indices = @transform_2, window_bounds = array<i64: 8, 1>}, {transform_indices = @transform_3, window_bounds = array<i64: 1, 8, 384>}]} {
    %c0 = arith.constant 0 : index
    %c0_0 = arith.constant 0 : index
    %c0_1 = arith.constant 0 : index
    %0 = vector.load %arg1[%c0, %c0_0, %c0_1] : memref<1x4x512xf32, #tpu.memory_space<vmem>>, vector<1x4x384xf32>
    %1 = vector.shape_cast %0 : vector<1x4x384xf32> to vector<4x384xf32>
    %c0_2 = arith.constant 0 : index
    %c0_3 = arith.constant 0 : index
    %2 = vector.load %arg5[%c0_2, %c0_3] : memref<36x384xf32, #tpu.memory_space<vmem>>, vector<4x384xf32>
    tpu.vector_store %arg5[%c0_2, %c0_3], %1 {strides = array<i32>} : memref<36x384xf32, #tpu.memory_space<vmem>>, vector<4x384xf32>,
    %c0_4 = arith.constant 0 : index
    %c0_5 = arith.constant 0 : index
    %c1 = arith.constant 1 : index
    %3 = vector.load %arg1[%c0_4, %c0_5, %c1] : memref<1x4x512xf32, #tpu.memory_space<vmem>>, vector<1x4x384xf32>
    %4 = vector.shape_cast %3 : vector<1x4x384xf32> to vector<4x384xf32>
    %c4 = arith.constant 4 : index
    %c0_6 = arith.constant 0 : index
    %5 = vector.load %arg5[%c4, %c0_6] : memref<36x384xf32, #tpu.memory_space<vmem>>, vector<4x384xf32>
    tpu.vector_store %arg5[%c4, %c0_6], %4 {strides = array<i32>} : memref<36x384xf32, #tpu.memory_space<vmem>>, vector<4x384xf32>,
    %c0_7 = arith.constant 0 : index
    %c0_8 = arith.constant 0 : index
    %c2 = arith.constant 2 : index
    %6 = vector.load %arg1[%c0_7, %c0_8, %c2] : memref<1x4x512xf32, #tpu.memory_space<vmem>>, vector<1x4x384xf32>
    %7 = vector.shape_cast %6 : vector<1x4x384xf32> to vector<4x384xf32>
    %c8 = arith.constant 8 : index
    %c0_9 = arith.constant 0 : index
    %8 = vector.load %arg5[%c8, %c0_9] : memref<36x384xf32, #tpu.memory_space<vmem>>, vector<4x384xf32>
    tpu.vector_store %arg5[%c8, %c0_9], %7 {strides = array<i32>} : memref<36x384xf32, #tpu.memory_space<vmem>>, vector<4x384xf32>,
    %c0_10 = arith.constant 0 : index
    %c0_11 = arith.constant 0 : index
    %c18 = arith.constant 18 : index
    %9 = vector.load %arg1[%c0_10, %c0_11, %c18] : memref<1x4x512xf32, #tpu.memory_space<vmem>>, vector<1x4x384xf32>
    %10 = vector.shape_cast %9 : vector<1x4x384xf32> to vector<4x384xf32>
    %c12 = arith.constant 12 : index
    %c0_12 = arith.constant 0 : index
    %11 = vector.load %arg5[%c12, %c0_12] : memref<36x384xf32, #tpu.memory_space<vmem>>, vector<4x384xf32>
    tpu.vector_store %arg5[%c12, %c0_12], %10 {strides = array<i32>} : memref<36x384xf32, #tpu.memory_space<vmem>>, vector<4x384xf32>,
    %c0_13 = arith.constant 0 : index
    %c0_14 = arith.constant 0 : index
    %c19 = arith.constant 19 : index
    %12 = vector.load %arg1[%c0_13, %c0_14, %c19] : memref<1x4x512xf32, #tpu.memory_space<vmem>>, vector<1x4x384xf32>
    %13 = vector.shape_cast %12 : vector<1x4x384xf32> to vector<4x384xf32>
    %c16 = arith.constant 16 : index
    %c0_15 = arith.constant 0 : index
    %14 = vector.load %arg5[%c16, %c0_15] : memref<36x384xf32, #tpu.memory_space<vmem>>, vector<4x384xf32>
    tpu.vector_store %arg5[%c16, %c0_15], %13 {strides = array<i32>} : memref<36x384xf32, #tpu.memory_space<vmem>>, vector<4x384xf32>,
    %c0_16 = arith.constant 0 : index
    %c0_17 = arith.constant 0 : index
    %c20 = arith.constant 20 : index
    %15 = vector.load %arg1[%c0_16, %c0_17, %c20] : memref<1x4x512xf32, #tpu.memory_space<vmem>>, vector<1x4x384xf32>
    %16 = vector.shape_cast %15 : vector<1x4x384xf32> to vector<4x384xf32>
    %c20_18 = arith.constant 20 : index
    %c0_19 = arith.constant 0 : index
    %17 = vector.load %arg5[%c20_18, %c0_19] : memref<36x384xf32, #tpu.memory_space<vmem>>, vector<4x384xf32>
    tpu.vector_store %arg5[%c20_18, %c0_19], %16 {strides = array<i32>} : memref<36x384xf32, #tpu.memory_space<vmem>>, vector<4x384xf32>,
    %c0_20 = arith.constant 0 : index
    %c0_21 = arith.constant 0 : index
    %c36 = arith.constant 36 : index
    %18 = vector.load %arg1[%c0_20, %c0_21, %c36] : memref<1x4x512xf32, #tpu.memory_space<vmem>>, vector<1x4x384xf32>
    %19 = vector.shape_cast %18 : vector<1x4x384xf32> to vector<4x384xf32>
    %c24 = arith.constant 24 : index
    %c0_22 = arith.constant 0 : index
    %20 = vector.load %arg5[%c24, %c0_22] : memref<36x384xf32, #tpu.memory_space<vmem>>, vector<4x384xf32>
    tpu.vector_store %arg5[%c24, %c0_22], %19 {strides = array<i32>} : memref<36x384xf32, #tpu.memory_space<vmem>>, vector<4x384xf32>,
    %c0_23 = arith.constant 0 : index
    %c0_24 = arith.constant 0 : index
    %c37 = arith.constant 37 : index
    %21 = vector.load %arg1[%c0_23, %c0_24, %c37] : memref<1x4x512xf32, #tpu.memory_space<vmem>>, vector<1x4x384xf32>
    %22 = vector.shape_cast %21 : vector<1x4x384xf32> to vector<4x384xf32>
    %c28 = arith.constant 28 : index
    %c0_25 = arith.constant 0 : index
    %23 = vector.load %arg5[%c28, %c0_25] : memref<36x384xf32, #tpu.memory_space<vmem>>, vector<4x384xf32>
    tpu.vector_store %arg5[%c28, %c0_25], %22 {strides = array<i32>} : memref<36x384xf32, #tpu.memory_space<vmem>>, vector<4x384xf32>,
    %c0_26 = arith.constant 0 : index
    %c0_27 = arith.constant 0 : index
    %c38 = arith.constant 38 : index
    %24 = vector.load %arg1[%c0_26, %c0_27, %c38] : memref<1x4x512xf32, #tpu.memory_space<vmem>>, vector<1x4x384xf32>
    %25 = vector.shape_cast %24 : vector<1x4x384xf32> to vector<4x384xf32>
    %c32 = arith.constant 32 : index
    %c0_28 = arith.constant 0 : index
    %26 = vector.load %arg5[%c32, %c0_28] : memref<36x384xf32, #tpu.memory_space<vmem>>, vector<4x384xf32>
    tpu.vector_store %arg5[%c32, %c0_28], %25 {strides = array<i32>} : memref<36x384xf32, #tpu.memory_space<vmem>>, vector<4x384xf32>,
    %c0_29 = arith.constant 0 : index
    %c0_30 = arith.constant 0 : index
    %27 = vector.load %arg2[%c0_29, %c0_30] : memref<8x36xf32, #tpu.memory_space<vmem>>, vector<8x36xf32>
    %c0_31 = arith.constant 0 : index
    %c0_32 = arith.constant 0 : index
    %28 = vector.load %arg5[%c0_31, %c0_32] : memref<36x384xf32, #tpu.memory_space<vmem>>, vector<36x384xf32>
    %cst = arith.constant dense<0.000000e+00> : vector<8x384xf32>
    %29 = tpu.matmul %27, %28, %cst {dimension_numbers = #tpu.dot_dimension_numbers<[1], [0], [0], [1], [0, 0, 1, 1], [], []>} : vector<8x36xf32>, vector<36x384xf32>, vector<8x384xf32> -> vector<8x384xf32>
    %c0_33 = arith.constant 0 : index
    %c0_34 = arith.constant 0 : index
    %30 = vector.load %arg3[%c0_33, %c0_34] : memref<8x1xf32, #tpu.memory_space<vmem>>, vector<8x1xf32>
    %31 = vector.broadcast %30 : vector<8x1xf32> to vector<8x384xf32>
    %32 = arith.addf %29, %31 : vector<8x384xf32>
    %c0_35 = arith.constant 0 : index
    %c0_36 = arith.constant 0 : index
    %c0_37 = arith.constant 0 : index
    %33 = vector.load %arg4[%c0_35, %c0_36, %c0_37] : memref<1x8x384xf32, #tpu.memory_space<vmem>>, vector<1x8x384xf32>
    %34 = vector.shape_cast %33 : vector<1x8x384xf32> to vector<8x384xf32>
    %35 = vector.shape_cast %32 : vector<8x384xf32> to vector<1x8x384xf32>
    tpu.vector_store %arg4[%c0_35, %c0_36, %c0_37], %35 {strides = array<i32>} : memref<1x8x384xf32, #tpu.memory_space<vmem>>, vector<1x8x384xf32>,
    return
  }
  func.func @transform_0(%arg0: i32) -> (i32, i32, i32) {
    %c0_i32 = arith.constant 0 : i32
    %c0_i32_0 = arith.constant 0 : i32
    %c0_i32_1 = arith.constant 0 : i32
    return %arg0, %c0_i32, %c0_i32_0 : i32, i32, i32
  }
  func.func @transform_1(%arg0: i32) -> (i32, i32) {
    %c0_i32 = arith.constant 0 : i32
    %c0_i32_0 = arith.constant 0 : i32
    %c0_i32_1 = arith.constant 0 : i32
    return %c0_i32, %c0_i32_0 : i32, i32
  }
  func.func @transform_2(%arg0: i32) -> (i32, i32) {
    %c0_i32 = arith.constant 0 : i32
    %c0_i32_0 = arith.constant 0 : i32
    %c0_i32_1 = arith.constant 0 : i32
    return %c0_i32, %c0_i32_0 : i32, i32
  }
  func.func @transform_3(%arg0: i32) -> (i32, i32, i32) {
    %c0_i32 = arith.constant 0 : i32
    %c0_i32_0 = arith.constant 0 : i32
    %c0_i32_1 = arith.constant 0 : i32
    return %arg0, %c0_i32, %c0_i32_0 : i32, i32, i32
  }
}

</mosaic_0001>

<llo_original>
// kernel: tpu_custom_call.1
$region0: #{tpu_custom_call.1}
  #allocation0 [shape = 'u32[]', space=smem, size = 0x4, offset = 0x4, fixed_abs, tag = 'smem constant byte address 0x4 - core index']
  #allocation1 [shape = 'u32[144,128]{1,0:T(1,128)}', space=vmem, size = 0x12000, scoped, tag = 'internal scratch']
  #allocation2 [shape = 'f32[36,384]{1,0:T(8,128)}', space=vmem, size = 0xf000, scoped, tag = 'scratch operand']
  %s0 = inlined_call_operand.hbm [shape: f32[2,4,512], index: 0, kind: input, shape index: {}]
  %s1 = inlined_call_operand.vmem [shape: f32[8,36], index: 1, kind: input, shape index: {}]
  %s2 = inlined_call_operand.vmem [shape: f32[8,1], index: 2, kind: input, shape index: {}]
  %s3 = inlined_call_operand.hbm [shape: f32[2,8,384], index: 3, kind: output, shape index: {}]
  %s4 = sld [smem:[#allocation0]]
  $region49: #{tpu_custom_call.1} parent=0
    _
  %s6 = ssub.s32 1, %s4
  %s7 = scalar_select 0, %s6, %s4
  $region1: #{tpu_custom_call.1} parent=0
    #allocation3 [shape = 'u8[16384]{0}', space=vmem, size = 0x4000, scoped, tag = 'input window, operand 0']
    #allocation4 [shape = 's32[2]{0}', space=sflag, size = 0x8, scoped, tag = 'scoped memory for tpu_custom_call.1']
    #allocation5 [shape = 's32[2]{0}', space=sflag, size = 0x8, scoped, tag = 'scoped memory for tpu_custom_call.1']
    #allocation6 [shape = 'u8[24576]{0}', space=vmem, size = 0x6000, scoped, tag = 'output window, operand 0']
    %8 = vsyncpa [#allocation4], 0
    %s9 = scalar_lea.sflag [#allocation4], 1
    %10 = vsyncpa %s9, 0
    %11 = vsyncpa [#allocation5], 0
    %s12 = scalar_lea.sflag [#allocation5], 1
    %13 = vsyncpa %s12, 0
    loop: start=0, step=1, limit=4
    $region2: #{tpu_custom_call.1} parent=1 // loop_pre_header
      _
    $region3: #{tpu_custom_call.1} parent=1 // loop_header
      %s15 = sphi 0, %s19
      %p16 = scmp.ge.s32.totalorder %s15, 4
      %s25 = sphi 0, %s27
      %s28 = sphi 0, %s25
      %s29 = sphi 0, %s28
      %s45 = sphi 0, %s29
      %s49 = sphi 0, %s49
      %s51 = sphi 0, %s49
      %s52 = sphi 0, %s51
      %s66 = sphi 0, %s52
      %s70 = sphi 0, %s70
      %s72 = sphi 0, %s70
      %s73 = sphi 0, %s72
      %s87 = sphi 0, %s73
      %s93 = sphi 0, %s95
      %s96 = sphi 0, %s93
      %s97 = sphi 0, %s96
      %s113 = sphi 0, %s97
    $region4: #{tpu_custom_call.1} parent=1 // loop_header_branch
      %18 = sbr.rel (%p16) target = $region8
    $region5: #{tpu_custom_call.1} parent=1 // loop_body
      %s20 = ssub.s32 %s15, 1
      %s21 = ssub.s32 %s15, 2
      %s22 = sadd.s32 %s15, 1
      %s23 = ssub.s32 %s15, %s22
      %p24 = scmp.eq.s32.totalorder %s23, 0
      %s26 = sadd.s32 %s25, 1
      %s27 = scalar_select %p24, %s25, %s26
      %p30 = pneg %p24
      %p31 = scmp.eq.s32.totalorder %s15, 1
      %p32 = por %p30, %p31
      %p33 = scmp.ne.s32.totalorder %s25, %s28
      %p34 = scmp.eq.s32.totalorder %s15, 0
      %p35 = por %p33, %p34
      %p36 = scmp.ne.s32.totalorder %s25, %s28
      %p37 = scmp.eq.s32.totalorder %s20, 1
      %p38 = por %p36, %p37
      %p39 = scmp.ne.s32.totalorder %s28, %s29
      %p40 = scmp.eq.s32.totalorder %s20, 0
      %p41 = por %p39, %p40
      %p42 = scmp.ne.s32.totalorder %s28, %s29
      %p43 = scmp.eq.s32.totalorder %s21, 1
      %p44 = por %p42, %p43
      %p46 = scmp.ne.s32.totalorder %s29, %s45
      %p47 = scmp.eq.s32.totalorder %s21, 0
      %p48 = por %p46, %p47
      %s50 = sadd.s32 %s49, 1
      %p53 = scmp.eq.s32.totalorder %s15, 1
      %p54 = scmp.ne.s32.totalorder %s49, %s51
      %p55 = scmp.eq.s32.totalorder %s15, 0
      %p56 = por %p54, %p55
      %p57 = scmp.ne.s32.totalorder %s49, %s51
      %p58 = scmp.eq.s32.totalorder %s20, 1
      %p59 = por %p57, %p58
      %p60 = scmp.ne.s32.totalorder %s51, %s52
      %p61 = scmp.eq.s32.totalorder %s20, 0
      %p62 = por %p60, %p61
      %p63 = scmp.ne.s32.totalorder %s51, %s52
      %p64 = scmp.eq.s32.totalorder %s21, 1
      %p65 = por %p63, %p64
      %p67 = scmp.ne.s32.totalorder %s52, %s66
      %p68 = scmp.eq.s32.totalorder %s21, 0
      %p69 = por %p67, %p68
      %s71 = sadd.s32 %s70, 1
      %p74 = scmp.eq.s32.totalorder %s15, 1
      %p75 = scmp.ne.s32.totalorder %s70, %s72
      %p76 = scmp.eq.s32.totalorder %s15, 0
      %p77 = por %p75, %p76
      %p78 = scmp.ne.s32.totalorder %s70, %s72
      %p79 = scmp.eq.s32.totalorder %s20, 1
      %p80 = por %p78, %p79
      %p81 = scmp.ne.s32.totalorder %s72, %s73
      %p82 = scmp.eq.s32.totalorder %s20, 0
      %p83 = por %p81, %p82
      %p84 = scmp.ne.s32.totalorder %s72, %s73
      %p85 = scmp.eq.s32.totalorder %s21, 1
      %p86 = por %p84, %p85
      %p88 = scmp.ne.s32.totalorder %s73, %s87
      %p89 = scmp.eq.s32.totalorder %s21, 0
      %p90 = por %p88, %p89
      %s91 = ssub.s32 %s15, %s22
      %p92 = scmp.eq.s32.totalorder %s91, 0
      %s94 = sadd.s32 %s93, 1
      %s95 = scalar_select %p92, %s93, %s94
      %p98 = pneg %p92
      %p99 = scmp.eq.s32.totalorder %s15, 1
      %p100 = por %p98, %p99
      %p101 = scmp.ne.s32.totalorder %s93, %s96
      %p102 = scmp.eq.s32.totalorder %s15, 0
      %p103 = por %p101, %p102
      %p104 = scmp.ne.s32.totalorder %s93, %s96
      %p105 = scmp.eq.s32.totalorder %s20, 1
      %p106 = por %p104, %p105
      %p107 = scmp.ne.s32.totalorder %s96, %s97
      %p108 = scmp.eq.s32.totalorder %s20, 0
      %p109 = por %p107, %p108
      %p110 = scmp.ne.s32.totalorder %s96, %s97
      %p111 = scmp.eq.s32.totalorder %s21, 1
      %p112 = por %p110, %p111
      %p114 = scmp.ne.s32.totalorder %s97, %s113
      %p115 = scmp.eq.s32.totalorder %s21, 0
      %p116 = por %p114, %p115
      %p117 = scmp.le.s32.totalorder 1, %s15
      %p118 = scmp.lt.s32.totalorder %s15, 3
      %p119 = pnand %p117, %p118
      %p120 = pneg %p119
      // Predicated region
      $region9: #{tpu_custom_call.1} parent=5 // pred_check
        _
      $region10: #{tpu_custom_call.1} parent=5 // pred_check_branch
        %122 = sbr.rel (%p119) target = $region12
      $region11: #{tpu_custom_call.1} parent=5 // pred_region
        %s123 = ssub.s32 %s15, 1
        // Predicated region
        $region13: #{tpu_custom_call.1} parent=11 // pred_check
          %p124 = pneg %p62
        $region14: #{tpu_custom_call.1} parent=11 // pred_check_branch
          %126 = sbr.rel (%p124) target = $region16
        $region15: #{tpu_custom_call.1} parent=11 // pred_region
          _
        $region16: #{tpu_custom_call.1} parent=11 // pred_fallthru
          _
        // Predicated region
        $region17: #{tpu_custom_call.1} parent=11 // pred_check
          %p127 = pneg %p83
        $region18: #{tpu_custom_call.1} parent=11 // pred_check_branch
          %129 = sbr.rel (%p127) target = $region20
        $region19: #{tpu_custom_call.1} parent=11 // pred_region
          _
        $region20: #{tpu_custom_call.1} parent=11 // pred_fallthru
          _
      $region12: #{tpu_custom_call.1} parent=5 // pred_fallthru
        _
      %p130 = scmp.lt.s32.totalorder %s15, 2
      // Predicated region
      $region21: #{tpu_custom_call.1} parent=5 // pred_check
        %p131 = pneg %p130
      $region22: #{tpu_custom_call.1} parent=5 // pred_check_branch
        %133 = sbr.rel (%p131) target = $region24
      $region23: #{tpu_custom_call.1} parent=5 // pred_region
        // Predicated region
        $region25: #{tpu_custom_call.1} parent=23 // pred_check
          %p134 = pneg %p35
        $region26: #{tpu_custom_call.1} parent=23 // pred_check_branch
          %136 = sbr.rel (%p134) target = $region28
        $region27: #{tpu_custom_call.1} parent=23 // pred_region
          %s137 = sand.u32 %s25, 1
          %s138 = scalar_lea.sflag [#allocation4], %s137
          %s139 = sand.u32 %s25, 1
          %s140 = smul.addr %s139, 16
          %s141 = scalar_lea.vmem [#allocation3], %s140
          %s143 = ssub.s32 256, 256
          %144 = vsyncadd %s138, %s143
          %s145 = smul.addr %s15, 4
          %s146 = smul.addr %s145, 64
          %s147 = scalar_lea.hbm %s0, %s146
          %s149 = sshll.u32 %s141, 4
          %s150 = int_to_ptr.vmem [resolvable:$true] %s149
          %152 = dma.hbm_to_vmem [thread:$0]  %s147, 256, %s150, %s138
        $region28: #{tpu_custom_call.1} parent=23 // pred_fallthru
          _
      $region24: #{tpu_custom_call.1} parent=5 // pred_fallthru
        _
      %p153 = scmp.le.s32.totalorder 1, %s15
      %p154 = scmp.lt.s32.totalorder %s15, 3
      %p155 = pnand %p153, %p154
      %p156 = pneg %p155
      // Predicated region
      $region29: #{tpu_custom_call.1} parent=5 // pred_check
        _
      $region30: #{tpu_custom_call.1} parent=5 // pred_check_branch
        %158 = sbr.rel (%p155) target = $region32
      $region31: #{tpu_custom_call.1} parent=5 // pred_region
        %s159 = ssub.s32 %s15, 1
        %s160 = sand.u32 %s28, 1
        %s161 = scalar_lea.sflag [#allocation4], %s160
        %s162 = sand.u32 %s28, 1
        %s163 = smul.addr %s162, 16
        %s164 = scalar_lea.vmem [#allocation3], %s163
        // Predicated region
        $region33: #{tpu_custom_call.1} parent=31 // pred_check
          %p165 = pneg %p41
        $region34: #{tpu_custom_call.1} parent=31 // pred_check_branch
          %167 = sbr.rel (%p165) target = $region36
        $region35: #{tpu_custom_call.1} parent=31 // pred_region
          %168 = dma.done %s161, 256
        $region36: #{tpu_custom_call.1} parent=31 // pred_fallthru
          _
        %s169 = sand.u32 %s28, 1
        %s170 = scalar_lea.sflag [#allocation4], %s169
        %s171 = sand.u32 %s28, 1
        %s172 = smul.addr %s171, 16
        %s173 = scalar_lea.vmem [#allocation3], %s172
        %p174 = pneg %p41
        %p175 = pneg %p38
        %p176 = pneg %p62
        %p177 = pneg %p59
        %p178 = pneg %p83
        %p179 = pneg %p80
        %p180 = pneg %p109
        %p181 = pneg %p106
        %s182 = sand.u32 %s96, 1
        %s183 = scalar_lea.sflag [#allocation5], %s182
        %s184 = sand.u32 %s96, 1
        %s185 = smul.addr %s184, 24
        %s186 = scalar_lea.vmem [#allocation6], %s185
        %v187 = vld [vmem:[%s164] sm:$0xff]
        %v188 = vld [vmem:[%s164 + $0x8] sm:$0xf]
        %v190 = vcombine.high %v187, %v187
        %192 = vst [vmem:[#allocation2] sm:$0xf] %v187
        %193 = vst [vmem:[#allocation2 + $0x8] sm:$0xf] %v190
        %194 = vst [vmem:[#allocation2 + $0x10] sm:$0xf] %v188
        %v195 = vld [vmem:[%s164] sm:$0xff]
        %v196 = vld [vmem:[%s164 + $0x8] sm:$0xff]
        %v199 = vcombine.low %v195, %v195
        %v200 = vcombine.low %v196, %v196
        %201 = vrot.lane.b32.xlu0 %v199, 127
        %v202 = vpop.permute.xlu0 %201
        %203 = vrot.lane.b32.xlu0 %v195, 127
        %v204 = vpop.permute.xlu0 %203
        %205 = vrot.lane.b32.xlu0 %v200, 127
        %v206 = vpop.permute.xlu0 %205
        %207 = vrot.lane.b32.xlu0 %v196, 127
        %v208 = vpop.permute.xlu0 %207
        %vm209 = vcmask 1039360
        %v210 = vsel %vm209, %v202, %v204
        %v211 = vsel %vm209, %v204, %v206
        %v212 = vsel %vm209, %v206, %v208
        %216 = vst [vmem:[#allocation2] sm:$0xf0] %v210
        %217 = vst [vmem:[#allocation2 + $0x8] sm:$0xf0] %v211
        %218 = vst [vmem:[#allocation2 + $0x10] sm:$0xf0] %v212
        %v219 = vld [vmem:[%s164] sm:$0xff]
        %v220 = vld [vmem:[%s164 + $0x8] sm:$0xff]
        %v223 = vcombine.high %v219, %v219
        %v224 = vcombine.high %v220, %v220
        %225 = vrot.lane.b32.xlu0 %v219, 126
        %v226 = vpop.permute.xlu0 %225
        %227 = vrot.lane.b32.xlu0 %v223, 126
        %v228 = vpop.permute.xlu0 %227
        %229 = vrot.lane.b32.xlu0 %v220, 126
        %v230 = vpop.permute.xlu0 %229
        %231 = vrot.lane.b32.xlu0 %v224, 126
        %v232 = vpop.permute.xlu0 %231
        %vm233 = vcmask 1031168
        %v234 = vsel %vm233, %v226, %v228
        %v235 = vsel %vm233, %v228, %v230
        %v236 = vsel %vm233, %v230, %v232
        %240 = vst [vmem:[#allocation2 + $0x18] sm:$0xf] %v234
        %241 = vst [vmem:[#allocation2 + $0x20] sm:$0xf] %v235
        %242 = vst [vmem:[#allocation2 + $0x28] sm:$0xf] %v236
        %v243 = vld [vmem:[%s164] sm:$0xff]
        %v244 = vld [vmem:[%s164 + $0x8] sm:$0xff]
        %v247 = vcombine.low %v243, %v243
        %v248 = vcombine.low %v244, %v244
        %249 = vrot.lane.b32.xlu0 %v247, 110
        %v250 = vpop.permute.xlu0 %249
        %251 = vrot.lane.b32.xlu0 %v243, 110
        %v252 = vpop.permute.xlu0 %251
        %253 = vrot.lane.b32.xlu0 %v248, 110
        %v254 = vpop.permute.xlu0 %253
        %255 = vrot.lane.b32.xlu0 %v244, 110
        %v256 = vpop.permute.xlu0 %255
        %vm257 = vcmask 900096
        %v258 = vsel %vm257, %v250, %v252
        %v259 = vsel %vm257, %v252, %v254
        %v260 = vsel %vm257, %v254, %v256
        %264 = vst [vmem:[#allocation2 + $0x18] sm:$0xf0] %v258
        %265 = vst [vmem:[#allocation2 + $0x20] sm:$0xf0] %v259
        %266 = vst [vmem:[#allocation2 + $0x28] sm:$0xf0] %v260
        %v267 = vld [vmem:[%s164] sm:$0xff]
        %v268 = vld [vmem:[%s164 + $0x8] sm:$0xff]
        %v271 = vcombine.high %v267, %v267
        %v272 = vcombine.high %v268, %v268
        %273 = vrot.lane.b32.xlu0 %v267, 109
        %v274 = vpop.permute.xlu0 %273
        %275 = vrot.lane.b32.xlu0 %v271, 109
        %v276 = vpop.permute.xlu0 %275
        %277 = vrot.lane.b32.xlu0 %v268, 109
        %v278 = vpop.permute.xlu0 %277
        %279 = vrot.lane.b32.xlu0 %v272, 109
        %v280 = vpop.permute.xlu0 %279
        %vm281 = vcmask 891904
        %v282 = vsel %vm281, %v274, %v276
        %v283 = vsel %vm281, %v276, %v278
        %v284 = vsel %vm281, %v278, %v280
        %288 = vst [vmem:[#allocation2 + $0x30] sm:$0xf] %v282
        %289 = vst [vmem:[#allocation2 + $0x38] sm:$0xf] %v283
        %290 = vst [vmem:[#allocation2 + $0x40] sm:$0xf] %v284
        %v291 = vld [vmem:[%s164] sm:$0xff]
        %v292 = vld [vmem:[%s164 + $0x8] sm:$0xff]
        %v295 = vcombine.low %v291, %v291
        %v296 = vcombine.low %v292, %v292
        %297 = vrot.lane.b32.xlu0 %v295, 108
        %v298 = vpop.permute.xlu0 %297
        %299 = vrot.lane.b32.xlu0 %v291, 108
        %v300 = vpop.permute.xlu0 %299
        %301 = vrot.lane.b32.xlu0 %v296, 108
        %v302 = vpop.permute.xlu0 %301
        %303 = vrot.lane.b32.xlu0 %v292, 108
        %v304 = vpop.permute.xlu0 %303
        %vm305 = vcmask 883712
        %v306 = vsel %vm305, %v298, %v300
        %v307 = vsel %vm305, %v300, %v302
        %v308 = vsel %vm305, %v302, %v304
        %312 = vst [vmem:[#allocation2 + $0x30] sm:$0xf0] %v306
        %313 = vst [vmem:[#allocation2 + $0x38] sm:$0xf0] %v307
        %314 = vst [vmem:[#allocation2 + $0x40] sm:$0xf0] %v308
        %v315 = vld [vmem:[%s164] sm:$0xff]
        %v316 = vld [vmem:[%s164 + $0x8] sm:$0xff]
        %v319 = vcombine.high %v315, %v315
        %v320 = vcombine.high %v316, %v316
        %321 = vrot.lane.b32.xlu0 %v315, 92
        %v322 = vpop.permute.xlu0 %321
        %323 = vrot.lane.b32.xlu0 %v319, 92
        %v324 = vpop.permute.xlu0 %323
        %325 = vrot.lane.b32.xlu0 %v316, 92
        %v326 = vpop.permute.xlu0 %325
        %327 = vrot.lane.b32.xlu0 %v320, 92
        %v328 = vpop.permute.xlu0 %327
        %vm329 = vcmask 752640
        %v330 = vsel %vm329, %v322, %v324
        %v331 = vsel %vm329, %v324, %v326
        %v332 = vsel %vm329, %v326, %v328
        %336 = vst [vmem:[#allocation2 + $0x48] sm:$0xf] %v330
        %337 = vst [vmem:[#allocation2 + $0x50] sm:$0xf] %v331
        %338 = vst [vmem:[#allocation2 + $0x58] sm:$0xf] %v332
        %v339 = vld [vmem:[%s164] sm:$0xff]
        %v340 = vld [vmem:[%s164 + $0x8] sm:$0xff]
        %v343 = vcombine.low %v339, %v339
        %v344 = vcombine.low %v340, %v340
        %345 = vrot.lane.b32.xlu0 %v343, 91
        %v346 = vpop.permute.xlu0 %345
        %347 = vrot.lane.b32.xlu0 %v339, 91
        %v348 = vpop.permute.xlu0 %347
        %349 = vrot.lane.b32.xlu0 %v344, 91
        %v350 = vpop.permute.xlu0 %349
        %351 = vrot.lane.b32.xlu0 %v340, 91
        %v352 = vpop.permute.xlu0 %351
        %vm353 = vcmask 744448
        %v354 = vsel %vm353, %v346, %v348
        %v355 = vsel %vm353, %v348, %v350
        %v356 = vsel %vm353, %v350, %v352
        %360 = vst [vmem:[#allocation2 + $0x48] sm:$0xf0] %v354
        %361 = vst [vmem:[#allocation2 + $0x50] sm:$0xf0] %v355
        %362 = vst [vmem:[#allocation2 + $0x58] sm:$0xf0] %v356
        %v363 = vld [vmem:[%s164] sm:$0xff]
        %v364 = vld [vmem:[%s164 + $0x8] sm:$0xff]
        %v367 = vcombine.high %v363, %v363
        %v368 = vcombine.high %v364, %v364
        %369 = vrot.lane.b32.xlu0 %v363, 90
        %v370 = vpop.permute.xlu0 %369
        %371 = vrot.lane.b32.xlu0 %v367, 90
        %v372 = vpop.permute.xlu0 %371
        %373 = vrot.lane.b32.xlu0 %v364, 90
        %v374 = vpop.permute.xlu0 %373
        %375 = vrot.lane.b32.xlu0 %v368, 90
        %v376 = vpop.permute.xlu0 %375
        %vm377 = vcmask 736256
        %v378 = vsel %vm377, %v370, %v372
        %v379 = vsel %vm377, %v372, %v374
        %v380 = vsel %vm377, %v374, %v376
        %384 = vst [vmem:[#allocation2 + $0x60] sm:$0xf] %v378
        %385 = vst [vmem:[#allocation2 + $0x68] sm:$0xf] %v379
        %386 = vst [vmem:[#allocation2 + $0x70] sm:$0xf] %v380
        %v387 = vld [vmem:[%s1] sm:$0xff]
        %v388 = vld [vmem:[#allocation2] sm:$0xff]
        %v389 = vld [vmem:[#allocation2 + $0x8] sm:$0xff]
        %v390 = vld [vmem:[#allocation2 + $0x10] sm:$0xff]
        %v391 = vld [vmem:[#allocation2 + $0x18] sm:$0xff]
        %v392 = vld [vmem:[#allocation2 + $0x20] sm:$0xff]
        %v393 = vld [vmem:[#allocation2 + $0x28] sm:$0xff]
        %v394 = vld [vmem:[#allocation2 + $0x30] sm:$0xff]
        %v395 = vld [vmem:[#allocation2 + $0x38] sm:$0xff]
        %v396 = vld [vmem:[#allocation2 + $0x40] sm:$0xff]
        %v397 = vld [vmem:[#allocation2 + $0x48] sm:$0xff]
        %v398 = vld [vmem:[#allocation2 + $0x50] sm:$0xff]
        %v399 = vld [vmem:[#allocation2 + $0x58] sm:$0xff]
        %v400 = vld [vmem:[#allocation2 + $0x60] sm:$0xf]
        %v401 = vld [vmem:[#allocation2 + $0x68] sm:$0xf]
        %v402 = vld [vmem:[#allocation2 + $0x70] sm:$0xf]
        %v403 = vld [vmem:[%s2] sm:$0xff]
        %405 = vset.pattern.permute.xlu0 0
        %406 = vperm.xlu0 %405, %v403
        %v407 = vpop.permute.xlu0 %406
        %vm409 = vcmask 293888
        %v411 = vsel %vm409, %v387, 0
        %vm413 = vcmask 1043456
        %v415 = vsel %vm413, %v400, 0
        %v418 = vsel %vm413, %v401, 0
        %v421 = vsel %vm413, %v402, 0
        %423 = vmatprep.subr.mxu0 %v389
        %424 = vmatpush1.msra.mxu0 %v388
        %425 = vmatprep.subr.mxu0 %v392
        %426 = vmatpush1.msra.mxu0 %v391
        %427 = vmatprep.subr.mxu0 %v395
        %428 = vmatpush1.msra.mxu0 %v394
        %429 = vmatprep.subr.mxu0 %v398
        %430 = vmatpush1.msra.mxu0 %v397
        %431 = vmatprep.subr.mxu0 %v418
        %432 = vmatpush1.msra.mxu0 %v415
        %433 = vmatprep.subr.mxu0 0.0
        %434 = vmatpush1.msra.mxu0 0.0
        %435 = vmatprep.subr.mxu0 0.0
        %436 = vmatpush1.msra.mxu0 0.0
        %437 = vmatprep.subr.mxu0 0.0
        %438 = vmatpush1.msra.mxu0 0.0
        %439 = vmatprep.subr.mxu0 0.0
        %440 = vmatpush1.msra.mxu0 0.0
        %441 = vmatprep.subr.mxu0 0.0
        %442 = vmatpush1.msra.mxu0 0.0
        %443 = vmatprep.subr.mxu0 0.0
        %444 = vmatpush1.msra.mxu0 0.0
        %445 = vmatprep.subr.mxu0 0.0
        %446 = vmatpush1.msra.mxu0 0.0
        %447 = vmatprep.subr.mxu0 0.0
        %448 = vmatpush1.msra.mxu0 0.0
        %449 = vmatprep.subr.mxu0 0.0
        %450 = vmatpush1.msra.mxu0 0.0
        %451 = vmatprep.subr.mxu0 0.0
        %452 = vmatpush1.msra.mxu0 0.0
        %453 = vmatprep.subr.mxu0 0.0
        %454 = vmatpush1.msra.mxu0 0.0
        %455 = vmatprep.subr.mxu0 0.0
        %456 = vmatpush1.msra.mxu0 0.0
        %457 = vmatprep.subr.mxu0 0.0
        %458 = vmatpush1.msra.mxu0 0.0
        %459 = vmatprep.subr.mxu0 0.0
        %460 = vmatpush1.msra.mxu0 0.0
        %461 = vmatprep.subr.mxu0 0.0
        %462 = vmatpush1.msra.mxu0 0.0
        %463 = vmatprep.subr.mxu0 0.0
        %464 = vmatpush1.msra.mxu0 0.0
        %465 = vmatprep.subr.mxu0 0.0
        %466 = vmatpush1.msra.mxu0 0.0
        %467 = vmatprep.subr.mxu0 0.0
        %468 = vmatpush1.msra.mxu0 0.0
        %469 = vmatprep.subr.mxu0 0.0
        %470 = vmatpush1.msra.mxu0 0.0
        %471 = vmatprep.subr.mxu0 0.0
        %472 = vmatpush1.msra.mxu0 0.0
        %473 = vmatprep.subr.mxu0 0.0
        %474 = vmatpush1.msra.mxu0 0.0
        %475 = vmatprep.subr.mxu0 0.0
        %476 = vmatpush1.msra.mxu0 0.0
        %477 = vmatprep.subr.mxu0 0.0
        %478 = vmatpush1.msra.mxu0 0.0
        %479 = vmatprep.subr.mxu0 0.0
        %480 = vmatpush1.msra.mxu0 0.0
        %481 = vmatprep.subr.mxu0 0.0
        %482 = vmatpush1.msra.mxu0 0.0
        %483 = vmatprep.subr.mxu0 0.0
        %484 = vmatpush1.msra.mxu0 0.0
        %485 = vmatprep.subr.mxu0 0.0
        %486 = vmatpush1.msra.mxu0 0.0
        %487 = vmatprep.mubr.f32.mxu0 0.0
        %488 = vmatmul.mubr.f32.gmra.mrb[0].mxu0 %v411
        %v489 = vpop.f32.mrb[0].mxu0
        %v490 = vadd.f32 %v407, %v489
        %v491 = vpop.f32.mrb[0].mxu0
        %v492 = vadd.f32 %v407, %v491
        %493 = vdwg.mxu0
        %494 = vmatprep.subr.mxu0 0.0
        %495 = vmatpush1.msra.mxu0 %v390
        %496 = vmatprep.subr.mxu0 0.0
        %497 = vmatpush1.msra.mxu0 %v393
        %498 = vmatprep.subr.mxu0 0.0
        %499 = vmatpush1.msra.mxu0 %v396
        %500 = vmatprep.subr.mxu0 0.0
        %501 = vmatpush1.msra.mxu0 %v399
        %502 = vmatprep.subr.mxu0 0.0
        %503 = vmatpush1.msra.mxu0 %v421
        %504 = vmatprep.subr.mxu0 0.0
        %505 = vmatpush1.msra.mxu0 0.0
        %506 = vmatprep.subr.mxu0 0.0
        %507 = vmatpush1.msra.mxu0 0.0
        %508 = vmatprep.subr.mxu0 0.0
        %509 = vmatpush1.msra.mxu0 0.0
        %510 = vmatprep.subr.mxu0 0.0
        %511 = vmatpush1.msra.mxu0 0.0
        %512 = vmatprep.subr.mxu0 0.0
        %513 = vmatpush1.msra.mxu0 0.0
        %514 = vmatprep.subr.mxu0 0.0
        %515 = vmatpush1.msra.mxu0 0.0
        %516 = vmatprep.subr.mxu0 0.0
        %517 = vmatpush1.msra.mxu0 0.0
        %518 = vmatprep.subr.mxu0 0.0
        %519 = vmatpush1.msra.mxu0 0.0
        %520 = vmatprep.subr.mxu0 0.0
        %521 = vmatpush1.msra.mxu0 0.0
        %522 = vmatprep.subr.mxu0 0.0
        %523 = vmatpush1.msra.mxu0 0.0
        %524 = vmatprep.subr.mxu0 0.0
        %525 = vmatpush1.msra.mxu0 0.0
        %526 = vmatprep.subr.mxu0 0.0
        %527 = vmatpush1.msra.mxu0 0.0
        %528 = vmatprep.subr.mxu0 0.0
        %529 = vmatpush1.msra.mxu0 0.0
        %530 = vmatprep.subr.mxu0 0.0
        %531 = vmatpush1.msra.mxu0 0.0
        %532 = vmatprep.subr.mxu0 0.0
        %533 = vmatpush1.msra.mxu0 0.0
        %534 = vmatprep.subr.mxu0 0.0
        %535 = vmatpush1.msra.mxu0 0.0
        %536 = vmatprep.subr.mxu0 0.0
        %537 = vmatpush1.msra.mxu0 0.0
        %538 = vmatprep.subr.mxu0 0.0
        %539 = vmatpush1.msra.mxu0 0.0
        %540 = vmatprep.subr.mxu0 0.0
        %541 = vmatpush1.msra.mxu0 0.0
        %542 = vmatprep.subr.mxu0 0.0
        %543 = vmatpush1.msra.mxu0 0.0
        %544 = vmatprep.subr.mxu0 0.0
        %545 = vmatpush1.msra.mxu0 0.0
        %546 = vmatprep.subr.mxu0 0.0
        %547 = vmatpush1.msra.mxu0 0.0
        %548 = vmatprep.subr.mxu0 0.0
        %549 = vmatpush1.msra.mxu0 0.0
        %550 = vmatprep.subr.mxu0 0.0
        %551 = vmatpush1.msra.mxu0 0.0
        %552 = vmatprep.subr.mxu0 0.0
        %553 = vmatpush1.msra.mxu0 0.0
        %554 = vmatprep.subr.mxu0 0.0
        %555 = vmatpush1.msra.mxu0 0.0
        %556 = vmatprep.subr.mxu0 0.0
        %557 = vmatpush1.msra.mxu0 0.0
        %558 = vmatprep.mubr.f32.mxu0 0.0
        %559 = vmatmul.mubr.f32.gmra.mrb[0].mxu0 %v411
        %v560 = vpop.f32.mrb[0].mxu0
        %v561 = vadd.f32 %v407, %v560
        %v562 = vpop.f32.mrb[0].mxu0
        %563 = vdwg.mxu0
        %564 = vst [vmem:[%s186] sm:$0xff] %v490
        %565 = vst [vmem:[%s186 + $0x8] sm:$0xff] %v492
        %566 = vst [vmem:[%s186 + $0x10] sm:$0xff] %v561
        %s567 = sand.u32 %s96, 1
        %s568 = scalar_lea.sflag [#allocation5], %s567
        %s569 = sand.u32 %s96, 1
        %s570 = smul.addr %s569, 24
        %s571 = scalar_lea.vmem [#allocation6], %s570
        // Predicated region
        $region37: #{tpu_custom_call.1} parent=31 // pred_check
          %p572 = pneg %p106
        $region38: #{tpu_custom_call.1} parent=31 // pred_check_branch
          %574 = sbr.rel (%p572) target = $region40
        $region39: #{tpu_custom_call.1} parent=31 // pred_region
          %s576 = ssub.s32 384, 384
          %577 = vsyncadd %s568, %s576
          %s578 = smul.addr %s20, 3
          %s579 = smul.addr %s578, 128
          %s580 = scalar_lea.hbm %s3, %s579
          %s582 = sshll.u32 %s571, 4
          %s583 = int_to_ptr.vmem [resolvable:$true] %s582
          %585 = dma.vmem_to_hbm [thread:$0]  %s583, 384, %s580, %s568
        $region40: #{tpu_custom_call.1} parent=31 // pred_fallthru
          _
      $region32: #{tpu_custom_call.1} parent=5 // pred_fallthru
        _
      %p586 = scmp.le.s32.totalorder 2, %s15
      // Predicated region
      $region41: #{tpu_custom_call.1} parent=5 // pred_check
        %p587 = pneg %p586
      $region42: #{tpu_custom_call.1} parent=5 // pred_check_branch
        %589 = sbr.rel (%p587) target = $region44
      $region43: #{tpu_custom_call.1} parent=5 // pred_region
        %s590 = ssub.s32 %s15, 2
        // Predicated region
        $region45: #{tpu_custom_call.1} parent=43 // pred_check
          %p591 = pneg %p112
        $region46: #{tpu_custom_call.1} parent=43 // pred_check_branch
          %593 = sbr.rel (%p591) target = $region48
        $region47: #{tpu_custom_call.1} parent=43 // pred_region
          %s594 = sand.u32 %s97, 1
          %s595 = scalar_lea.sflag [#allocation5], %s594
          %s596 = sand.u32 %s97, 1
          %s597 = smul.addr %s596, 24
          %s598 = scalar_lea.vmem [#allocation6], %s597
          %599 = dma.done %s595, 384
        $region48: #{tpu_custom_call.1} parent=43 // pred_fallthru
          _
      $region44: #{tpu_custom_call.1} parent=5 // pred_fallthru
        _
    $region6: #{tpu_custom_call.1} parent=1 // loop_footer
      %s19 = sadd.s32 1, %s15
    $region7: #{tpu_custom_call.1} parent=1 // loop_footer_branch
      %14 = sbr.rel target = $region3
    $region8: #{tpu_custom_call.1} parent=1 // loop_exit
      _
    %600 = vsyncpa [#allocation4], 1
    %s601 = scalar_lea.sflag [#allocation4], 1
    %602 = vsyncpa %s601, 1
    %603 = vsyncpa [#allocation5], 1
    %s604 = scalar_lea.sflag [#allocation5], 1
    %605 = vsyncpa %s604, 1

</llo_original>
